<compile_context>
chip_gen: v6e
topology: v6e:2x2x1
jax: 0.10.0
libtpu: 0.0.40
codegen_flags: <defaults>
</compile_context>

<pallas_src>
import functools
import math

import jax
import jax.numpy as jnp
from jax.experimental import pallas as pl
from jax.experimental.pallas import tpu as pltpu

NEG_SLOPE = 0.01  # F.leaky_relu default
LANE = 128
SUBLANE = 8


def _lrelu(v):
    return jnp.where(v >= 0, v, NEG_SLOPE * v)


def _round_up(x, m):
    return (x + m - 1) // m * m


def _pad2(a, rows, cols, dtype=None):
    r, c = a.shape
    out = jnp.pad(a, ((0, rows - r), (0, cols - c)))
    return out.astype(dtype) if dtype is not None else out


def _vmem_cap_bytes():
    try:
        cap = int(pltpu.get_tpu_info().vmem_capacity_bytes)
        if cap > 0:
            return cap
    except Exception:
        pass
    return 64 << 20  # conservative fallback: v7x per-TensorCore physical VMEM


def _vmem_limit(stream_bytes, resident_bytes):
    # 2x double-buffered streamed tiles + resident (weights/scratch) + compiler headroom,
    # capped below physical VMEM (112 MiB hard-codes do not fit v7x).
    want = 2 * int(stream_bytes) + int(resident_bytes) + (4 << 20)
    cap = int(0.85 * _vmem_cap_bytes())
    return int(min(cap, max(want, 8 << 20)))


# --------------------------------------------------------------------------------------
# prep kernel:  x0 = F.normalize(concat(preference, MLP(features)), dim=1)
# --------------------------------------------------------------------------------------
def prep_kernel(num_user, tile_r, feat_ref, pref_ref, mlpw_ref, mlpb_ref, x0_ref):
    f32 = jnp.float32
    row0 = pl.program_id(0) * tile_r
    row = row0 + jax.lax.broadcasted_iota(jnp.int32, (tile_r, 1), 0)

    def normalize_store(raw):
        # F.normalize (L2 over dim=1, eps=1e-12) via a single EUP rsqrt.
        sumsq = jnp.sum(raw * raw, axis=1, keepdims=True)
        inv = jax.lax.rsqrt(jnp.maximum(sumsq, 1e-24))  # == 1 / max(||x||, 1e-12)
        x0_ref[...] = (raw * inv).astype(x0_ref.dtype)

    @pl.when(row0 + tile_r <= num_user)          # user-only tile: no MLP matmul at all
    def _user_only():
        normalize_store(pref_ref[...].astype(f32))

    @pl.when(row0 + tile_r > num_user)           # tile contains item rows
    def _has_items():
        temp = jnp.dot(feat_ref[...], mlpw_ref[...],
                       preferred_element_type=f32) + mlpb_ref[...]
        raw = jnp.where(row < num_user, pref_ref[...].astype(f32), temp)
        normalize_store(raw)


def _prep_call(feat_slab, pref_slab, mlp_w, mlp_b, num_user, n_p, tile_r):
    df_p = feat_slab.shape[1]
    dl_p = pref_slab.shape[1]
    n_tiles = n_p // tile_r
    mixed_tile = num_user // tile_r                 # first tile containing an item row
    feat_tiles = feat_slab.shape[0] // tile_r
    pref_tiles = pref_slab.shape[0] // tile_r

    # Clamped block indices: user-only tiles keep re-pointing at the same feature block
    # (so its DMA is not re-issued) and item-only tiles likewise for the preference block.
    def feat_map(i):
        return (jnp.clip(i - mixed_tile, 0, feat_tiles - 1), 0)

    def pref_map(i):
        return (jnp.minimum(i, pref_tiles - 1), 0)

    stream = tile_r * (df_p * 2 + dl_p * 2 + dl_p * 2)       # feat + pref + out (bf16)
    resident = mlp_w.size * 2 + mlp_b.size * 4
    cost = pl.CostEstimate(
        flops=int(2 * feat_slab.shape[0] * df_p * dl_p),
        transcendentals=0,
        bytes_accessed=int(feat_slab.size * 2 + pref_slab.size * 2
                           + n_p * dl_p * 2 + resident))

    return pl.pallas_call(
        functools.partial(prep_kernel, num_user, tile_r),
        out_shape=jax.ShapeDtypeStruct((n_p, dl_p), jnp.bfloat16),
        grid=(n_tiles,),
        in_specs=[
            pl.BlockSpec((tile_r, df_p), feat_map),           # item features (bf16, streamed)
            pl.BlockSpec((tile_r, dl_p), pref_map),           # user preference (bf16, streamed)
            pl.BlockSpec((df_p, dl_p), lambda i: (0, 0)),     # MLP weight (resident)
            pl.BlockSpec((1, dl_p), lambda i: (0, 0)),        # MLP bias   (resident)
        ],
        out_specs=pl.BlockSpec((tile_r, dl_p), lambda i: (i, 0)),
        compiler_params=pltpu.CompilerParams(
            dimension_semantics=("parallel",),
            vmem_limit_bytes=_vmem_limit(stream, resident)),
        cost_estimate=cost,
    )(feat_slab, pref_slab, mlp_w, mlp_b)


# --------------------------------------------------------------------------------------
# one GCN layer (concate=False, has_id=True, aggr='add' expressed as dense A @ x):
#   agg   = A_rows @ x                     (K-split accumulation, f32 scratch)
#   h     = leaky_relu(agg @ Wc)           (epilogue, once per row tile)
#   x_hat = leaky_relu(x_rows @ Wl + bl) + id_rows
#   out   = leaky_relu(h @ Wg + bg + x_hat)
# --------------------------------------------------------------------------------------
def layer_kernel(x_k_ref, x_row_ref, adj_ref, id_ref,
                 cw_ref, lw_ref, lb_ref, gw_ref, gb_ref, out_ref, acc_ref):
    f32 = jnp.float32
    k = pl.program_id(1)

    @pl.when(k == 0)
    def _init():
        acc_ref[...] = jnp.zeros_like(acc_ref)

    # int8 adjacency block -> bf16 MXU operand (int8 storage halves the dominant HBM
    # stream; counts 0/1/2 are exact).  int8 -> f32 -> bf16 keeps conversions on the
    # well-supported VPU paths.
    adj_bf = adj_ref[...].astype(f32).astype(jnp.bfloat16)
    acc_ref[...] += jnp.dot(adj_bf, x_k_ref[...], preferred_element_type=f32)

    @pl.when(k == pl.num_programs(1) - 1)
    def _epilogue():
        bf16 = jnp.bfloat16
        # conv projection hoisted out of the K loop: done once per row tile.
        h = _lrelu(jnp.dot(acc_ref[...].astype(bf16), cw_ref[...],
                           preferred_element_type=f32))
        x_hat = _lrelu(jnp.dot(x_row_ref[...], lw_ref[...],
                               preferred_element_type=f32) + lb_ref[...]) + id_ref[...]
        out = _lrelu(jnp.dot(h.astype(bf16), gw_ref[...],
                             preferred_element_type=f32) + gb_ref[...] + x_hat)
        out_ref[...] = out.astype(out_ref.dtype)


def _layer_call(x_full, adj_i8, id_p, cw, lw, lb, gw, gb, tile, out_dtype):
    n_p, din_p = x_full.shape
    dmid_p = cw.shape[1]
    di_p = lw.shape[1]
    gr = n_p // tile
    grid = (gr, gr)

    out_b = jnp.dtype(out_dtype).itemsize
    stream = tile * (tile * 1          # adj int8 block
                     + din_p * 2       # x K-block (bf16)
                     + din_p * 2       # x row block (bf16)
                     + di_p * 4        # id block (f32)
                     + di_p * out_b)   # out block
    resident = ((cw.size + lw.size + gw.size) * 2 + (lb.size + gb.size) * 4
                + tile * din_p * 4)    # f32 accumulator scratch
    cost = pl.CostEstimate(
        flops=int(2 * n_p * n_p * din_p + 2 * n_p * din_p * dmid_p
                  + 2 * n_p * din_p * di_p + 2 * n_p * dmid_p * di_p),
        transcendentals=0,
        bytes_accessed=int(n_p * n_p                 # int8 adjacency
                           + gr * n_p * din_p * 2    # x re-streamed once per row tile
                           + n_p * din_p * 2         # x row stream
                           + n_p * di_p * 4          # id
                           + n_p * di_p * out_b      # out
                           + resident))

    return pl.pallas_call(
        layer_kernel,
        out_shape=jax.ShapeDtypeStruct((n_p, di_p), out_dtype),
        grid=grid,
        in_specs=[
            pl.BlockSpec((tile, din_p), lambda i, k: (k, 0)),   # x, K-streamed (aggregation)
            pl.BlockSpec((tile, din_p), lambda i, k: (i, 0)),   # x, row tile (linear path)
            pl.BlockSpec((tile, tile), lambda i, k: (i, k)),    # int8 adjacency block
            pl.BlockSpec((tile, di_p), lambda i, k: (i, 0)),    # id_embedding row tile
            pl.BlockSpec((din_p, dmid_p), lambda i, k: (0, 0)),  # conv weight (resident)
            pl.BlockSpec((din_p, di_p), lambda i, k: (0, 0)),    # linear weight
            pl.BlockSpec((1, di_p), lambda i, k: (0, 0)),        # linear bias
            pl.BlockSpec((dmid_p, di_p), lambda i, k: (0, 0)),   # g weight
            pl.BlockSpec((1, di_p), lambda i, k: (0, 0)),        # g bias
        ],
        out_specs=pl.BlockSpec((tile, di_p), lambda i, k: (i, 0)),
        scratch_shapes=[pltpu.VMEM((tile, din_p), jnp.float32)],
        compiler_params=pltpu.CompilerParams(
            dimension_semantics=("parallel", "arbitrary"),
            vmem_limit_bytes=_vmem_limit(stream, resident)),
        cost_estimate=cost,
    )(x_full, x_full, adj_i8, id_p, cw, lw, lb, gw, gb)


# --------------------------------------------------------------------------------------
# wrapper: padding / dtype plumbing + the three pallas_calls
# --------------------------------------------------------------------------------------
def gcn_forward(features, id_embedding, preference, adj, params, num_user, *, tile_rows=512):
    num_item, dim_feat = features.shape
    dim_latent = params["mlp_w"].shape[1]
    dim_id = params["l1_w"].shape[1]
    n = num_user + num_item

    # A single lane-aligned tile edge tiles BOTH the row axis and the K (column) axis of
    # the dense adjacency, so VMEM use is independent of N.  Multiple of 128 keeps adj
    # blocks lane-legal and int8 sublane tiling legal; output tiles stay lane-dense.
    tile = _round_up(min(tile_rows, n), LANE)
    n_p = _round_up(n, tile)
    df_p = _round_up(dim_feat, LANE)
    dl_p = _round_up(dim_latent, LANE)
    di_p = _round_up(dim_id, LANE)

    bf16 = jnp.bfloat16
    f32 = jnp.float32
    n_tiles = n_p // tile
    mixed_tile = num_user // tile                       # first tile containing an item row
    feat_tiles = max(n_tiles - mixed_tile, 1)
    pref_tiles = max(-(-num_user // tile), 1)

    # Item features aligned so global row (mixed_tile*tile + j) maps to slab row j:
    # whole user-only tiles of zero features are never materialized in HBM.
    feat_off = num_user - mixed_tile * tile
    feat_slab = jnp.zeros((feat_tiles * tile, df_p), bf16)
    feat_slab = feat_slab.at[feat_off:feat_off + num_item, :dim_feat].set(features.astype(bf16))

    pref_slab = jnp.zeros((pref_tiles * tile, dl_p), bf16)
    pref_slab = pref_slab.at[:num_user, :dim_latent].set(preference.astype(bf16))

    # NOTE: int8 adjacency is exact only for edge multiplicities <= 127 (plenty here).
    # Padded rows/cols are zero, which keeps the normalized-bias garbage living in padded
    # x rows (rows n..n_p-1) from ever leaking into real rows; the wrapper slices [:n].
    adj_i8 = _pad2(adj, n_p, n_p).astype(jnp.int8)
    id_p = _pad2(id_embedding, n_p, di_p, f32)

    mlp_w = _pad2(params["mlp_w"], df_p, dl_p, bf16)
    mlp_b = _pad2(params["mlp_b"], 1, dl_p, f32)

    c1 = _pad2(params["c1_w"], dl_p, dl_p, bf16)
    l1 = _pad2(params["l1_w"], dl_p, di_p, bf16)
    b1 = _pad2(params["l1_b"], 1, di_p, f32)
    g1 = _pad2(params["g1_w"], dl_p, di_p, bf16)
    gb1 = _pad2(params["g1_b"], 1, di_p, f32)

    c2 = _pad2(params["c2_w"], di_p, di_p, bf16)
    l2 = _pad2(params["l2_w"], di_p, di_p, bf16)
    b2 = _pad2(params["l2_b"], 1, di_p, f32)
    g2 = _pad2(params["g2_w"], di_p, di_p, bf16)
    gb2 = _pad2(params["g2_b"], 1, di_p, f32)

    x0 = _prep_call(feat_slab, pref_slab, mlp_w, mlp_b, num_user, n_p, tile)      # (n_p, dl_p) bf16
    x1 = _layer_call(x0, adj_i8, id_p, c1, l1, b1, g1, gb1, tile, bf16)           # (n_p, di_p) bf16
    x2 = _layer_call(x1, adj_i8, id_p, c2, l2, b2, g2, gb2, tile, f32)            # (n_p, di_p) f32
    return x2[:n, :dim_id]


def gcn_ref(features, id_emb, pref, adj, p):
    """Pure-JAX f32 reference mirroring the PyTorch forward (dense aggregation)."""
    temp = features @ p["mlp_w"] + p["mlp_b"]
    x = jnp.concatenate([pref, temp], axis=0)
    x = x / jnp.maximum(jnp.sqrt(jnp.sum(x * x, axis=1, keepdims=True)), 1e-12)
    h = _lrelu(adj @ (x @ p["c1_w"]))
    x_hat = _lrelu(x @ p["l1_w"] + p["l1_b"]) + id_emb
    x = _lrelu(h @ p["g1_w"] + p["g1_b"] + x_hat)
    h = _lrelu(adj @ (x @ p["c2_w"]))
    x_hat = _lrelu(x @ p["l2_w"] + p["l2_b"]) + id_emb
    x = _lrelu(h @ p["g2_w"] + p["g2_b"] + x_hat)
    return x


if __name__ == "__main__":
    NUM_USER, NUM_ITEM = 128, 256
    N = NUM_USER + NUM_ITEM
    DIM_FEAT, DIM_LATENT, DIM_ID = 64, 32, 32

    key = jax.random.PRNGKey(0)
    ks = jax.random.split(key, 16)

    def xavier(k, fan_in, fan_out):
        std = (2.0 / (fan_in + fan_out)) ** 0.5
        return (std * jax.random.normal(k, (fan_in, fan_out))).astype(jnp.float32)

    # Inputs
    features = jax.random.normal(ks[0], (NUM_ITEM, DIM_FEAT), jnp.float32)
    id_embedding = jax.random.normal(ks[1], (N, DIM_ID), jnp.float32)
    preference = xavier(ks[2], NUM_USER, DIM_LATENT)  # xavier_normal_ preference

    # edge_index (bipartite user<->item, both directions) -> dense adjacency (sum aggr)
    src, dst = [], []
    for it in range(NUM_ITEM):
        for u in sorted({it % NUM_USER, (3 * it + 1) % NUM_USER}):
            src += [u, NUM_USER + it]
            dst += [NUM_USER + it, u]
    edge_index = jnp.array([src, dst], dtype=jnp.int32)
    adj = jnp.zeros((N, N), jnp.float32).at[edge_index[1], edge_index[0]].add(1.0)

    # Parameters (nn.Linear weights pre-transposed to (in, out)); small biases
    params = {
        "mlp_w": xavier(ks[3], DIM_FEAT, DIM_LATENT),
        "mlp_b": 0.01 * jax.random.normal(ks[4], (1, DIM_LATENT), jnp.float32),
        "c1_w": xavier(ks[5], DIM_LATENT, DIM_LATENT),
        "l1_w": xavier(ks[6], DIM_LATENT, DIM_ID),
        "l1_b": 0.01 * jax.random.normal(ks[7], (1, DIM_ID), jnp.float32),
        "g1_w": xavier(ks[8], DIM_LATENT, DIM_ID),
        "g1_b": 0.01 * jax.random.normal(ks[9], (1, DIM_ID), jnp.float32),
        "c2_w": xavier(ks[10], DIM_ID, DIM_ID),
        "l2_w": xavier(ks[11], DIM_ID, DIM_ID),
        "l2_b": 0.01 * jax.random.normal(ks[12], (1, DIM_ID), jnp.float32),
        "g2_w": xavier(ks[13], DIM_ID, DIM_ID),
        "g2_b": 0.01 * jax.random.normal(ks[14], (1, DIM_ID), jnp.float32),
    }

    # Small tile so the demo exercises a real (3 x 3) grid: row axis + K accumulation.
    out = gcn_forward(features, id_embedding, preference, adj, params, NUM_USER,
                      tile_rows=128)
    out = jax.block_until_ready(out)

    ref = gcn_ref(features, id_embedding, preference, adj, params)
    assert out.shape == (N, DIM_ID)
    max_diff = float(jnp.max(jnp.abs(out - ref)))
    # bf16 MXU operands (and bf16-streamed preference) with f32 accumulation vs a pure-f32
    # reference -> loose tolerance.
    assert jnp.allclose(out, ref, rtol=7.5e-2, atol=7.5e-2), (
        f"mismatch vs JAX reference, max abs diff = {max_diff}")

    print("KERNEL_OK")
</pallas_src>

<mosaic_0001>
module attributes {stable_mosaic.version = 11 : i64} {
  func.func @prep_kernel(%arg0: i32, %arg1: memref<128x128xbf16, #tpu.memory_space<vmem>>, %arg2: memref<128x128xbf16, #tpu.memory_space<vmem>>, %arg3: memref<128x128xbf16, #tpu.memory_space<vmem>>, %arg4: memref<1x128xf32, #tpu.memory_space<vmem>>, %arg5: memref<128x128xbf16, #tpu.memory_space<vmem>>) attributes {dimension_semantics = [#tpu.dimension_semantics<parallel>], iteration_bounds = array<i64: 3>, scalar_prefetch = 0 : i64, scratch_operands = 0 : i64, tpu.core_type = #tpu.core_type<tc>, window_params = [{transform_indices = @transform_0, window_bounds = array<i64: 128, 128>}, {transform_indices = @transform_1, window_bounds = array<i64: 128, 128>}, {pipeline_mode = #tpu.pipeline_mode<synchronous>, transform_indices = @transform_2, window_bounds = array<i64: 128, 128>}, {pipeline_mode = #tpu.pipeline_mode<synchronous>, transform_indices = @transform_3, window_bounds = array<i64: 1, 128>}, {transform_indices = @transform_4, window_bounds = array<i64: 128, 128>}]} {
    %c128_i32 = arith.constant 128 : i32
    %0 = arith.muli %arg0, %c128_i32 : i32
    %1 = tpu.iota {dimensions = array<i32: 0>} : vector<128x1xi32>
    %2 = vector.broadcast %0 : i32 to vector<128x1xi32>
    %3 = arith.addi %2, %1 : vector<128x1xi32>
    %c128_i32_0 = arith.constant 128 : i32
    %4 = arith.addi %0, %c128_i32_0 : i32
    %c128_i32_1 = arith.constant 128 : i32
    %5 = arith.cmpi sle, %4, %c128_i32_1 : i32
    %6 = arith.extui %5 : i1 to i32
    %c0_i32 = arith.constant 0 : i32
    %7 = arith.cmpi ne, %6, %c0_i32 : i32
    scf.if %7 {
      %c0 = arith.constant 0 : index
      %c0_5 = arith.constant 0 : index
      %12 = vector.load %arg2[%c0, %c0_5] : memref<128x128xbf16, #tpu.memory_space<vmem>>, vector<128x128xbf16>
      %13 = arith.extf %12 : vector<128x128xbf16> to vector<128x128xf32>
      %14 = arith.mulf %13, %13 : vector<128x128xf32>
      %cst = arith.constant dense<0.000000e+00> : vector<128xf32>
      %15 = vector.multi_reduction <add>, %14, %cst [1] : vector<128x128xf32> to vector<128xf32>
      %16 = vector.shape_cast %15 : vector<128xf32> to vector<128x1xf32>
      %cst_6 = arith.constant 1.000000e-24 : f32
      %17 = vector.broadcast %cst_6 : f32 to vector<128x1xf32>
      %18 = arith.maximumf %16, %17 : vector<128x1xf32>
      %19 = math.rsqrt %18 : vector<128x1xf32>
      %20 = vector.broadcast %19 : vector<128x1xf32> to vector<128x128xf32>
      %21 = arith.mulf %13, %20 : vector<128x128xf32>
      %22 = arith.truncf %21 : vector<128x128xf32> to vector<128x128xbf16>
      %c0_7 = arith.constant 0 : index
      %c0_8 = arith.constant 0 : index
      %23 = vector.load %arg5[%c0_7, %c0_8] : memref<128x128xbf16, #tpu.memory_space<vmem>>, vector<128x128xbf16>
      tpu.vector_store %arg5[%c0_7, %c0_8], %22 {strides = array<i32>} : memref<128x128xbf16, #tpu.memory_space<vmem>>, vector<128x128xbf16>,
    } else {
    }
    %c128_i32_2 = arith.constant 128 : i32
    %8 = arith.addi %0, %c128_i32_2 : i32
    %c128_i32_3 = arith.constant 128 : i32
    %9 = arith.cmpi sgt, %8, %c128_i32_3 : i32
    %10 = arith.extui %9 : i1 to i32
    %c0_i32_4 = arith.constant 0 : i32
    %11 = arith.cmpi ne, %10, %c0_i32_4 : i32
    scf.if %11 {
      %c0 = arith.constant 0 : index
      %c0_5 = arith.constant 0 : index
      %12 = vector.load %arg1[%c0, %c0_5] : memref<128x128xbf16, #tpu.memory_space<vmem>>, vector<128x128xbf16>
      %c0_6 = arith.constant 0 : index
      %c0_7 = arith.constant 0 : index
      %13 = vector.load %arg3[%c0_6, %c0_7] : memref<128x128xbf16, #tpu.memory_space<vmem>>, vector<128x128xbf16>
      %cst = arith.constant dense<0.000000e+00> : vector<128x128xf32>
      %14 = tpu.matmul %12, %13, %cst {dimension_numbers = #tpu.dot_dimension_numbers<[1], [0], [0], [1], [0, 0, 1, 1], [], []>} : vector<128x128xbf16>, vector<128x128xbf16>, vector<128x128xf32> -> vector<128x128xf32>
      %c0_8 = arith.constant 0 : index
      %c0_9 = arith.constant 0 : index
      %15 = vector.load %arg4[%c0_8, %c0_9] : memref<1x128xf32, #tpu.memory_space<vmem>>, vector<1x128xf32>
      %16 = vector.broadcast %15 : vector<1x128xf32> to vector<128x128xf32>
      %17 = arith.addf %14, %16 : vector<128x128xf32>
      %c128_i32_10 = arith.constant 128 : i32
      %18 = vector.broadcast %c128_i32_10 : i32 to vector<128x1xi32>
      %19 = arith.cmpi slt, %3, %18 : vector<128x1xi32>
      %c0_11 = arith.constant 0 : index
      %c0_12 = arith.constant 0 : index
      %20 = vector.load %arg2[%c0_11, %c0_12] : memref<128x128xbf16, #tpu.memory_space<vmem>>, vector<128x128xbf16>
      %21 = arith.extf %20 : vector<128x128xbf16> to vector<128x128xf32>
      %22 = vector.shape_cast %19 : vector<128x1xi1> to vector<128x1xi1>
      %23 = vector.broadcast %22 : vector<128x1xi1> to vector<128x128xi1>
      %24 = arith.select %23, %21, %17 : vector<128x128xi1>, vector<128x128xf32>
      %25 = arith.mulf %24, %24 : vector<128x128xf32>
      %cst_13 = arith.constant dense<0.000000e+00> : vector<128xf32>
      %26 = vector.multi_reduction <add>, %25, %cst_13 [1] : vector<128x128xf32> to vector<128xf32>
      %27 = vector.shape_cast %26 : vector<128xf32> to vector<128x1xf32>
      %cst_14 = arith.constant 1.000000e-24 : f32
      %28 = vector.broadcast %cst_14 : f32 to vector<128x1xf32>
      %29 = arith.maximumf %27, %28 : vector<128x1xf32>
      %30 = math.rsqrt %29 : vector<128x1xf32>
      %31 = vector.broadcast %30 : vector<128x1xf32> to vector<128x128xf32>
      %32 = arith.mulf %24, %31 : vector<128x128xf32>
      %33 = arith.truncf %32 : vector<128x128xf32> to vector<128x128xbf16>
      %c0_15 = arith.constant 0 : index
      %c0_16 = arith.constant 0 : index
      %34 = vector.load %arg5[%c0_15, %c0_16] : memref<128x128xbf16, #tpu.memory_space<vmem>>, vector<128x128xbf16>
      tpu.vector_store %arg5[%c0_15, %c0_16], %33 {strides = array<i32>} : memref<128x128xbf16, #tpu.memory_space<vmem>>, vector<128x128xbf16>,
    } else {
    }
    return
  }
  func.func @transform_0(%arg0: i32) -> (i32, i32) {
    %c1_i32 = arith.constant 1 : i32
    %0 = arith.subi %arg0, %c1_i32 : i32
    %c0_i32 = arith.constant 0 : i32
    %c1_i32_0 = arith.constant 1 : i32
    %1 = arith.maxsi %c0_i32, %0 : i32
    %2 = arith.minsi %c1_i32_0, %1 : i32
    %c0_i32_1 = arith.constant 0 : i32
    %c0_i32_2 = arith.constant 0 : i32
    return %2, %c0_i32_1 : i32, i32
  }
  func.func @transform_1(%arg0: i32) -> (i32, i32) {
    %c0_i32 = arith.constant 0 : i32
    %0 = arith.minsi %arg0, %c0_i32 : i32
    %c0_i32_0 = arith.constant 0 : i32
    %c0_i32_1 = arith.constant 0 : i32
    return %0, %c0_i32_0 : i32, i32
  }
  func.func @transform_2(%arg0: i32) -> (i32, i32) {
    %c0_i32 = arith.constant 0 : i32
    %c0_i32_0 = arith.constant 0 : i32
    %c0_i32_1 = arith.constant 0 : i32
    return %c0_i32, %c0_i32_0 : i32, i32
  }
  func.func @transform_3(%arg0: i32) -> (i32, i32) {
    %c0_i32 = arith.constant 0 : i32
    %c0_i32_0 = arith.constant 0 : i32
    %c0_i32_1 = arith.constant 0 : i32
    return %c0_i32, %c0_i32_0 : i32, i32
  }
  func.func @transform_4(%arg0: i32) -> (i32, i32) {
    %c0_i32 = arith.constant 0 : i32
    %c0_i32_0 = arith.constant 0 : i32
    return %arg0, %c0_i32 : i32, i32
  }
}

</mosaic_0001>

<llo_original>
// kernel: tpu_custom_call.1
$region0: #{tpu_custom_call.1}
  #allocation0 [shape = 'u32[]', space=smem, size = 0x4, offset = 0x4, fixed_abs, tag = 'smem constant byte address 0x4 - core index']
  #allocation1 [shape = 'u32[144,128]{1,0:T(1,128)}', space=vmem, size = 0x12000, scoped, tag = 'internal scratch']
  %s0 = inlined_call_operand.hbm [shape: bf16[256,128], index: 0, kind: input, shape index: {}]
  %s1 = inlined_call_operand.hbm [shape: bf16[128,128], index: 1, kind: input, shape index: {}]
  %s2 = inlined_call_operand.hbm [shape: bf16[128,128], index: 2, kind: input, shape index: {}]
  %s3 = inlined_call_operand.vmem [shape: f32[1,128], index: 3, kind: input, shape index: {}]
  %s4 = inlined_call_operand.hbm [shape: bf16[384,128], index: 4, kind: output, shape index: {}]
  %s5 = sld [smem:[#allocation0]]
  $region69: #{tpu_custom_call.1} parent=0
    _
  %s7 = ssub.s32 1, %s5
  %s8 = scalar_select 0, %s7, %s5
  $region1: #{tpu_custom_call.1} parent=0
    #allocation2 [shape = 'u8[65536]{0}', space=vmem, size = 0x10000, scoped, tag = 'input window, operand 0']
    #allocation3 [shape = 's32[2]{0}', space=sflag, size = 0x8, scoped, tag = 'scoped memory for tpu_custom_call.1']
    #allocation4 [shape = 's32[2]{0}', space=sflag, size = 0x8, scoped, tag = 'scoped memory for tpu_custom_call.1']
    #allocation5 [shape = 'u8[65536]{0}', space=vmem, size = 0x10000, scoped, tag = 'input window, operand 1']
    #allocation6 [shape = 's32[2]{0}', space=sflag, size = 0x8, scoped, tag = 'scoped memory for tpu_custom_call.1']
    #allocation7 [shape = 'u8[32768]{0}', space=vmem, size = 0x8000, scoped, tag = 'input window, operand 2, single buffered']
    #allocation8 [shape = 'u8[65536]{0}', space=vmem, size = 0x10000, scoped, tag = 'output window, operand 0']
    %9 = vsyncpa [#allocation3], 0
    %s10 = scalar_lea.sflag [#allocation3], 1
    %11 = vsyncpa %s10, 0
    %12 = vsyncpa [#allocation6], 0
    %s13 = scalar_lea.sflag [#allocation6], 1
    %14 = vsyncpa %s13, 0
    %15 = vsyncpa [#allocation4], 0
    %s16 = scalar_lea.sflag [#allocation4], 1
    %17 = vsyncpa %s16, 0
    loop: start=0, step=1, limit=5
    $region2: #{tpu_custom_call.1} parent=1 // loop_pre_header
      _
    $region3: #{tpu_custom_call.1} parent=1 // loop_header
      %s19 = sphi 0, %s23
      %p20 = scmp.ge.s32.totalorder %s19, 5
      %s39 = sphi 0, %s41
      %s42 = sphi 0, %s39
      %s43 = sphi 0, %s42
      %s59 = sphi 0, %s43
      %s69 = sphi 0, %s71
      %s72 = sphi 0, %s69
      %s73 = sphi 0, %s72
      %s89 = sphi 0, %s73
      %s93 = sphi 0, %s93
      %s95 = sphi 0, %s93
      %s96 = sphi 0, %s95
      %s110 = sphi 0, %s96
      %s114 = sphi 0, %s114
      %s116 = sphi 0, %s114
      %s117 = sphi 0, %s116
      %s131 = sphi 0, %s117
      %s137 = sphi 0, %s139
      %s140 = sphi 0, %s137
      %s141 = sphi 0, %s140
      %s157 = sphi 0, %s141
    $region4: #{tpu_custom_call.1} parent=1 // loop_header_branch
      %22 = sbr.rel (%p20) target = $region8
    $region5: #{tpu_custom_call.1} parent=1 // loop_body
      %s24 = ssub.s32 %s19, 1
      %s25 = ssub.s32 %s19, 2
      %s26 = sadd.s32 %s19, 1
      %s27 = ssub.s32 %s19, 1
      %p28 = scmp.gt.s32.totalorder %s27, 0
      %s29 = scalar_select %p28, %s27, 0
      %p30 = scmp.lt.s32.totalorder %s29, 1
      %s31 = scalar_select %p30, %s29, 1
      %s32 = ssub.s32 %s26, 1
      %p33 = scmp.gt.s32.totalorder %s32, 0
      %s34 = scalar_select %p33, %s32, 0
      %p35 = scmp.lt.s32.totalorder %s34, 1
      %s36 = scalar_select %p35, %s34, 1
      %s37 = ssub.s32 %s31, %s36
      %p38 = scmp.eq.s32.totalorder %s37, 0
      %s40 = sadd.s32 %s39, 1
      %s41 = scalar_select %p38, %s39, %s40
      %p44 = pneg %p38
      %p45 = scmp.eq.s32.totalorder %s19, 2
      %p46 = por %p44, %p45
      %p47 = scmp.ne.s32.totalorder %s39, %s42
      %p48 = scmp.eq.s32.totalorder %s19, 0
      %p49 = por %p47, %p48
      %p50 = scmp.ne.s32.totalorder %s39, %s42
      %p51 = scmp.eq.s32.totalorder %s24, 2
      %p52 = por %p50, %p51
      %p53 = scmp.ne.s32.totalorder %s42, %s43
      %p54 = scmp.eq.s32.totalorder %s24, 0
      %p55 = por %p53, %p54
      %p56 = scmp.ne.s32.totalorder %s42, %s43
      %p57 = scmp.eq.s32.totalorder %s25, 2
      %p58 = por %p56, %p57
      %p60 = scmp.ne.s32.totalorder %s43, %s59
      %p61 = scmp.eq.s32.totalorder %s25, 0
      %p62 = por %p60, %p61
      %p63 = scmp.lt.s32.totalorder %s19, 0
      %s64 = scalar_select %p63, %s19, 0
      %p65 = scmp.lt.s32.totalorder %s26, 0
      %s66 = scalar_select %p65, %s26, 0
      %s67 = ssub.s32 %s64, %s66
      %p68 = scmp.eq.s32.totalorder %s67, 0
      %s70 = sadd.s32 %s69, 1
      %s71 = scalar_select %p68, %s69, %s70
      %p74 = pneg %p68
      %p75 = scmp.eq.s32.totalorder %s19, 2
      %p76 = por %p74, %p75
      %p77 = scmp.ne.s32.totalorder %s69, %s72
      %p78 = scmp.eq.s32.totalorder %s19, 0
      %p79 = por %p77, %p78
      %p80 = scmp.ne.s32.totalorder %s69, %s72
      %p81 = scmp.eq.s32.totalorder %s24, 2
      %p82 = por %p80, %p81
      %p83 = scmp.ne.s32.totalorder %s72, %s73
      %p84 = scmp.eq.s32.totalorder %s24, 0
      %p85 = por %p83, %p84
      %p86 = scmp.ne.s32.totalorder %s72, %s73
      %p87 = scmp.eq.s32.totalorder %s25, 2
      %p88 = por %p86, %p87
      %p90 = scmp.ne.s32.totalorder %s73, %s89
      %p91 = scmp.eq.s32.totalorder %s25, 0
      %p92 = por %p90, %p91
      %s94 = sadd.s32 %s93, 1
      %p97 = scmp.eq.s32.totalorder %s19, 2
      %p98 = scmp.ne.s32.totalorder %s93, %s95
      %p99 = scmp.eq.s32.totalorder %s19, 0
      %p100 = por %p98, %p99
      %p101 = scmp.ne.s32.totalorder %s93, %s95
      %p102 = scmp.eq.s32.totalorder %s24, 2
      %p103 = por %p101, %p102
      %p104 = scmp.ne.s32.totalorder %s95, %s96
      %p105 = scmp.eq.s32.totalorder %s24, 0
      %p106 = por %p104, %p105
      %p107 = scmp.ne.s32.totalorder %s95, %s96
      %p108 = scmp.eq.s32.totalorder %s25, 2
      %p109 = por %p107, %p108
      %p111 = scmp.ne.s32.totalorder %s96, %s110
      %p112 = scmp.eq.s32.totalorder %s25, 0
      %p113 = por %p111, %p112
      %s115 = sadd.s32 %s114, 1
      %p118 = scmp.eq.s32.totalorder %s19, 2
      %p119 = scmp.ne.s32.totalorder %s114, %s116
      %p120 = scmp.eq.s32.totalorder %s19, 0
      %p121 = por %p119, %p120
      %p122 = scmp.ne.s32.totalorder %s114, %s116
      %p123 = scmp.eq.s32.totalorder %s24, 2
      %p124 = por %p122, %p123
      %p125 = scmp.ne.s32.totalorder %s116, %s117
      %p126 = scmp.eq.s32.totalorder %s24, 0
      %p127 = por %p125, %p126
      %p128 = scmp.ne.s32.totalorder %s116, %s117
      %p129 = scmp.eq.s32.totalorder %s25, 2
      %p130 = por %p128, %p129
      %p132 = scmp.ne.s32.totalorder %s117, %s131
      %p133 = scmp.eq.s32.totalorder %s25, 0
      %p134 = por %p132, %p133
      %s135 = ssub.s32 %s19, %s26
      %p136 = scmp.eq.s32.totalorder %s135, 0
      %s138 = sadd.s32 %s137, 1
      %s139 = scalar_select %p136, %s137, %s138
      %p142 = pneg %p136
      %p143 = scmp.eq.s32.totalorder %s19, 2
      %p144 = por %p142, %p143
      %p145 = scmp.ne.s32.totalorder %s137, %s140
      %p146 = scmp.eq.s32.totalorder %s19, 0
      %p147 = por %p145, %p146
      %p148 = scmp.ne.s32.totalorder %s137, %s140
      %p149 = scmp.eq.s32.totalorder %s24, 2
      %p150 = por %p148, %p149
      %p151 = scmp.ne.s32.totalorder %s140, %s141
      %p152 = scmp.eq.s32.totalorder %s24, 0
      %p153 = por %p151, %p152
      %p154 = scmp.ne.s32.totalorder %s140, %s141
      %p155 = scmp.eq.s32.totalorder %s25, 2
      %p156 = por %p154, %p155
      %p158 = scmp.ne.s32.totalorder %s141, %s157
      %p159 = scmp.eq.s32.totalorder %s25, 0
      %p160 = por %p158, %p159
      %p161 = scmp.le.s32.totalorder 1, %s19
      %p162 = scmp.lt.s32.totalorder %s19, 4
      %p163 = pnand %p161, %p162
      %p164 = pneg %p163
      // Predicated region
      $region9: #{tpu_custom_call.1} parent=5 // pred_check
        _
      $region10: #{tpu_custom_call.1} parent=5 // pred_check_branch
        %166 = sbr.rel (%p163) target = $region12
      $region11: #{tpu_custom_call.1} parent=5 // pred_region
        %s167 = ssub.s32 %s19, 1
        // Predicated region
        $region13: #{tpu_custom_call.1} parent=11 // pred_check
          %p168 = pneg %p106
        $region14: #{tpu_custom_call.1} parent=11 // pred_check_branch
          %170 = sbr.rel (%p168) target = $region16
        $region15: #{tpu_custom_call.1} parent=11 // pred_region
          %s172 = ssub.s32 1024, 1024
          %173 = vsyncadd [#allocation6], %s172
          %s174 = sshll.u32 [#allocation7], 4
          %s175 = int_to_ptr.vmem [resolvable:$true] %s174
          %180 = dma.hbm_to_vmem [thread:$0]  %s2, 1024, %s175, [#allocation6], 64, 64, 4
        $region16: #{tpu_custom_call.1} parent=11 // pred_fallthru
          _
        // Predicated region
        $region17: #{tpu_custom_call.1} parent=11 // pred_check
          %p181 = pneg %p127
        $region18: #{tpu_custom_call.1} parent=11 // pred_check_branch
          %183 = sbr.rel (%p181) target = $region20
        $region19: #{tpu_custom_call.1} parent=11 // pred_region
          _
        $region20: #{tpu_custom_call.1} parent=11 // pred_fallthru
          _
      $region12: #{tpu_custom_call.1} parent=5 // pred_fallthru
        _
      %p184 = scmp.lt.s32.totalorder %s19, 3
      // Predicated region
      $region21: #{tpu_custom_call.1} parent=5 // pred_check
        %p185 = pneg %p184
      $region22: #{tpu_custom_call.1} parent=5 // pred_check_branch
        %187 = sbr.rel (%p185) target = $region24
      $region23: #{tpu_custom_call.1} parent=5 // pred_region
        // Predicated region
        $region25: #{tpu_custom_call.1} parent=23 // pred_check
          %p188 = pneg %p49
        $region26: #{tpu_custom_call.1} parent=23 // pred_check_branch
          %190 = sbr.rel (%p188) target = $region28
        $region27: #{tpu_custom_call.1} parent=23 // pred_region
          %s191 = sand.u32 %s39, 1
          %s192 = scalar_lea.sflag [#allocation3], %s191
          %s193 = sand.u32 %s39, 1
          %s194 = smul.addr %s193, 64
          %s195 = scalar_lea.vmem [#allocation2], %s194
          %s196 = ssub.s32 %s19, 1
          %p197 = scmp.gt.s32.totalorder %s196, 0
          %s198 = scalar_select %p197, %s196, 0
          %p199 = scmp.lt.s32.totalorder %s198, 1
          %s200 = scalar_select %p199, %s198, 1
          %s201 = smul.u32 16, %s200
          %s203 = ssub.s32 1024, 1024
          %204 = vsyncadd %s192, %s203
          %s205 = smul.addr %s201, 64
          %s206 = scalar_lea.hbm %s0, %s205
          %s207 = sshll.u32 %s195, 4
          %s208 = int_to_ptr.vmem [resolvable:$true] %s207
          %213 = dma.hbm_to_vmem [thread:$0]  %s206, 1024, %s208, %s192, 64, 64, 4
        $region28: #{tpu_custom_call.1} parent=23 // pred_fallthru
          _
        // Predicated region
        $region29: #{tpu_custom_call.1} parent=23 // pred_check
          %p214 = pneg %p79
        $region30: #{tpu_custom_call.1} parent=23 // pred_check_branch
          %216 = sbr.rel (%p214) target = $region32
        $region31: #{tpu_custom_call.1} parent=23 // pred_region
          %s217 = sand.u32 %s19, 1
          %s218 = scalar_lea.sflag [#allocation6], %s217
          %s219 = sand.u32 %s69, 1
          %s220 = smul.addr %s219, 64
          %s221 = scalar_lea.vmem [#allocation5], %s220
          %p222 = scmp.lt.s32.totalorder %s19, 0
          %s223 = scalar_select %p222, %s19, 0
          %s224 = smul.u32 16, %s223
          %s226 = ssub.s32 1024, 1024
          %227 = vsyncadd %s218, %s226
          %s228 = smul.addr %s224, 64
          %s229 = scalar_lea.hbm %s1, %s228
          %s230 = sshll.u32 %s221, 4
          %s231 = int_to_ptr.vmem [resolvable:$true] %s230
          %236 = dma.hbm_to_vmem [thread:$0]  %s229, 1024, %s231, %s218, 64, 64, 4
        $region32: #{tpu_custom_call.1} parent=23 // pred_fallthru
          _
      $region24: #{tpu_custom_call.1} parent=5 // pred_fallthru
        _
      %p237 = scmp.le.s32.totalorder 1, %s19
      %p238 = scmp.lt.s32.totalorder %s19, 4
      %p239 = pnand %p237, %p238
      %p240 = pneg %p239
      // Predicated region
      $region33: #{tpu_custom_call.1} parent=5 // pred_check
        _
      $region34: #{tpu_custom_call.1} parent=5 // pred_check_branch
        %242 = sbr.rel (%p239) target = $region36
      $region35: #{tpu_custom_call.1} parent=5 // pred_region
        %s243 = ssub.s32 %s19, 1
        %s244 = sand.u32 %s42, 1
        %s245 = scalar_lea.sflag [#allocation3], %s244
        %s246 = sand.u32 %s42, 1
        %s247 = smul.addr %s246, 64
        %s248 = scalar_lea.vmem [#allocation2], %s247
        // Predicated region
        $region37: #{tpu_custom_call.1} parent=35 // pred_check
          %p249 = pneg %p55
        $region38: #{tpu_custom_call.1} parent=35 // pred_check_branch
          %251 = sbr.rel (%p249) target = $region40
        $region39: #{tpu_custom_call.1} parent=35 // pred_region
          %252 = dma.done %s245, 1024
        $region40: #{tpu_custom_call.1} parent=35 // pred_fallthru
          _
        %s253 = sand.u32 %s24, 1
        %s254 = scalar_lea.sflag [#allocation6], %s253
        %s255 = sand.u32 %s72, 1
        %s256 = smul.addr %s255, 64
        %s257 = scalar_lea.vmem [#allocation5], %s256
        // Predicated region
        $region41: #{tpu_custom_call.1} parent=35 // pred_check
          %p258 = pneg %p85
        $region42: #{tpu_custom_call.1} parent=35 // pred_check_branch
          %260 = sbr.rel (%p258) target = $region44
        $region43: #{tpu_custom_call.1} parent=35 // pred_region
          %261 = dma.done %s254, 1024
        $region44: #{tpu_custom_call.1} parent=35 // pred_fallthru
          _
        // Predicated region
        $region45: #{tpu_custom_call.1} parent=35 // pred_check
          %p262 = pneg %p106
        $region46: #{tpu_custom_call.1} parent=35 // pred_check_branch
          %264 = sbr.rel (%p262) target = $region48
        $region47: #{tpu_custom_call.1} parent=35 // pred_region
          %265 = dma.done [#allocation6], 1024
        $region48: #{tpu_custom_call.1} parent=35 // pred_fallthru
          _
        %s266 = sand.u32 %s42, 1
        %s267 = scalar_lea.sflag [#allocation3], %s266
        %s268 = sand.u32 %s42, 1
        %s269 = smul.addr %s268, 64
        %s270 = scalar_lea.vmem [#allocation2], %s269
        %p271 = pneg %p55
        %p272 = pneg %p52
        %s273 = sand.u32 %s24, 1
        %s274 = scalar_lea.sflag [#allocation6], %s273
        %s275 = sand.u32 %s72, 1
        %s276 = smul.addr %s275, 64
        %s277 = scalar_lea.vmem [#allocation5], %s276
        %p278 = pneg %p85
        %p279 = pneg %p82
        %p280 = pneg %p106
        %p281 = pneg %p103
        %p282 = pneg %p127
        %p283 = pneg %p124
        %p284 = pneg %p153
        %p285 = pneg %p150
        %s286 = sand.u32 %s140, 1
        %s287 = scalar_lea.sflag [#allocation4], %s286
        %s288 = sand.u32 %s140, 1
        %s289 = smul.addr %s288, 64
        %s290 = scalar_lea.vmem [#allocation8], %s289
        %s291 = ssub.s32 %s24, 1
        %p292 = scmp.gt.s32.totalorder %s291, 0
        %s293 = scalar_select %p292, %s291, 0
        %p294 = scmp.lt.s32.totalorder %s293, 1
        %s295 = scalar_select %p294, %s293, 1
        %s296 = smul.u32 16, %s295
        %p297 = scmp.lt.s32.totalorder %s24, 0
        %s298 = scalar_select %p297, %s24, 0
        %s299 = smul.u32 16, %s298
        %s300 = smul.u32 16, %s24
        %s302 = smul.u32 %s24, 128
        %v303 = vlaneseq
        %v304 = vshrl.u32 %v303, 7
        %v305 = vadd.s32 %v304, 8
        %v306 = vadd.s32 %v304, 16
        %v307 = vadd.s32 %v304, 24
        %v308 = vadd.s32 %v304, 32
        %v309 = vadd.s32 %v304, 40
        %v310 = vadd.s32 %v304, 48
        %v311 = vadd.s32 %v304, 56
        %v312 = vadd.s32 %v304, 64
        %v313 = vadd.s32 %v304, 72
        %v314 = vadd.s32 %v304, 80
        %v315 = vadd.s32 %v304, 88
        %v316 = vadd.s32 %v304, 96
        %v317 = vadd.s32 %v304, 104
        %v318 = vadd.s32 %v304, 112
        %v319 = vadd.s32 %v304, 120
        %v320 = vstv %s302
        %v321 = vadd.s32 %v320, %v304
        %v322 = vadd.s32 %v320, %v305
        %v323 = vadd.s32 %v320, %v306
        %v324 = vadd.s32 %v320, %v307
        %v325 = vadd.s32 %v320, %v308
        %v326 = vadd.s32 %v320, %v309
        %v327 = vadd.s32 %v320, %v310
        %v328 = vadd.s32 %v320, %v311
        %v329 = vadd.s32 %v320, %v312
        %v330 = vadd.s32 %v320, %v313
        %v331 = vadd.s32 %v320, %v314
        %v332 = vadd.s32 %v320, %v315
        %v333 = vadd.s32 %v320, %v316
        %v334 = vadd.s32 %v320, %v317
        %v335 = vadd.s32 %v320, %v318
        %v336 = vadd.s32 %v320, %v319
        %s337 = sadd.s32 %s302, 128
        %p338 = scmp.le.s32.totalorder %s337, 128
        // Predicated region
        $region49: #{tpu_custom_call.1} parent=35 // pred_check
          %p339 = pneg %p338
        $region50: #{tpu_custom_call.1} parent=35 // pred_check_branch
          %341 = sbr.rel (%p339) target = $region52
        $region51: #{tpu_custom_call.1} parent=35 // pred_region
          %v342 = vld [vmem:[%s257] sm:$0xf]
          %v343 = vld [vmem:[%s257 + $0x4] sm:$0xf]
          %v344 = vld [vmem:[%s257 + $0x8] sm:$0xf]
          %v345 = vld [vmem:[%s257 + $0xc] sm:$0xf]
          %v346 = vld [vmem:[%s257 + $0x10] sm:$0xf]
          %v347 = vld [vmem:[%s257 + $0x14] sm:$0xf]
          %v348 = vld [vmem:[%s257 + $0x18] sm:$0xf]
          %v349 = vld [vmem:[%s257 + $0x1c] sm:$0xf]
          %v350 = vld [vmem:[%s257 + $0x20] sm:$0xf]
          %v351 = vld [vmem:[%s257 + $0x24] sm:$0xf]
          %v352 = vld [vmem:[%s257 + $0x28] sm:$0xf]
          %v353 = vld [vmem:[%s257 + $0x2c] sm:$0xf]
          %v354 = vld [vmem:[%s257 + $0x30] sm:$0xf]
          %v355 = vld [vmem:[%s257 + $0x34] sm:$0xf]
          %v356 = vld [vmem:[%s257 + $0x38] sm:$0xf]
          %v357 = vld [vmem:[%s257 + $0x3c] sm:$0xf]
          %v358 = vunpack.c.l.bf16 %v342
          %v359 = vunpack.c.l.bf16 %v343
          %v360 = vunpack.c.l.bf16 %v344
          %v361 = vunpack.c.l.bf16 %v345
          %v362 = vunpack.c.l.bf16 %v346
          %v363 = vunpack.c.l.bf16 %v347
          %v364 = vunpack.c.l.bf16 %v348
          %v365 = vunpack.c.l.bf16 %v349
          %v366 = vunpack.c.l.bf16 %v350
          %v367 = vunpack.c.l.bf16 %v351
          %v368 = vunpack.c.l.bf16 %v352
          %v369 = vunpack.c.l.bf16 %v353
          %v370 = vunpack.c.l.bf16 %v354
          %v371 = vunpack.c.l.bf16 %v355
          %v372 = vunpack.c.l.bf16 %v356
          %v373 = vunpack.c.l.bf16 %v357
          %v374 = vmul.f32 %v358, %v358
          %v375 = vmul.f32 %v359, %v359
          %v376 = vmul.f32 %v360, %v360
          %v377 = vmul.f32 %v361, %v361
          %v378 = vmul.f32 %v362, %v362
          %v379 = vmul.f32 %v363, %v363
          %v380 = vmul.f32 %v364, %v364
          %v381 = vmul.f32 %v365, %v365
          %v382 = vmul.f32 %v366, %v366
          %v383 = vmul.f32 %v367, %v367
          %v384 = vmul.f32 %v368, %v368
          %v385 = vmul.f32 %v369, %v369
          %v386 = vmul.f32 %v370, %v370
          %v387 = vmul.f32 %v371, %v371
          %v388 = vmul.f32 %v372, %v372
          %v389 = vmul.f32 %v373, %v373
          %390 = vadd.xlane.f32.xlu0 %v374
          %v391 = vpop.xlane.xlu0 %390
          %392 = vadd.xlane.f32.xlu0 %v375
          %v393 = vpop.xlane.xlu0 %392
          %394 = vadd.xlane.f32.xlu0 %v376
          %v395 = vpop.xlane.xlu0 %394
          %396 = vadd.xlane.f32.xlu0 %v377
          %v397 = vpop.xlane.xlu0 %396
          %398 = vadd.xlane.f32.xlu0 %v378
          %v399 = vpop.xlane.xlu0 %398
          %400 = vadd.xlane.f32.xlu0 %v379
          %v401 = vpop.xlane.xlu0 %400
          %402 = vadd.xlane.f32.xlu0 %v380
          %v403 = vpop.xlane.xlu0 %402
          %404 = vadd.xlane.f32.xlu0 %v381
          %v405 = vpop.xlane.xlu0 %404
          %406 = vadd.xlane.f32.xlu0 %v382
          %v407 = vpop.xlane.xlu0 %406
          %408 = vadd.xlane.f32.xlu0 %v383
          %v409 = vpop.xlane.xlu0 %408
          %410 = vadd.xlane.f32.xlu0 %v384
          %v411 = vpop.xlane.xlu0 %410
          %412 = vadd.xlane.f32.xlu0 %v385
          %v413 = vpop.xlane.xlu0 %412
          %414 = vadd.xlane.f32.xlu0 %v386
          %v415 = vpop.xlane.xlu0 %414
          %416 = vadd.xlane.f32.xlu0 %v387
          %v417 = vpop.xlane.xlu0 %416
          %418 = vadd.xlane.f32.xlu0 %v388
          %v419 = vpop.xlane.xlu0 %418
          %420 = vadd.xlane.f32.xlu0 %v389
          %v421 = vpop.xlane.xlu0 %420
          %v422 = vmax.f32 %v391, 1e-24
          %v423 = vmax.f32 %v393, 1e-24
          %v424 = vmax.f32 %v395, 1e-24
          %v425 = vmax.f32 %v397, 1e-24
          %v426 = vmax.f32 %v399, 1e-24
          %v427 = vmax.f32 %v401, 1e-24
          %v428 = vmax.f32 %v403, 1e-24
          %v429 = vmax.f32 %v405, 1e-24
          %v430 = vmax.f32 %v407, 1e-24
          %v431 = vmax.f32 %v409, 1e-24
          %v432 = vmax.f32 %v411, 1e-24
          %v433 = vmax.f32 %v413, 1e-24
          %v434 = vmax.f32 %v415, 1e-24
          %v435 = vmax.f32 %v417, 1e-24
          %v436 = vmax.f32 %v419, 1e-24
          %v437 = vmax.f32 %v421, 1e-24
          %v438 = vrsqrt.pop %v422
          %v439 = vrsqrt.pop %v423
          %v440 = vrsqrt.pop %v424
          %v441 = vrsqrt.pop %v425
          %v442 = vrsqrt.pop %v426
          %v443 = vrsqrt.pop %v427
          %v444 = vrsqrt.pop %v428
          %v445 = vrsqrt.pop %v429
          %v446 = vrsqrt.pop %v430
          %v447 = vrsqrt.pop %v431
          %v448 = vrsqrt.pop %v432
          %v449 = vrsqrt.pop %v433
          %v450 = vrsqrt.pop %v434
          %v451 = vrsqrt.pop %v435
          %v452 = vrsqrt.pop %v436
          %v453 = vrsqrt.pop %v437
          %v454 = vmul.f32 %v358, %v438
          %v455 = vmul.f32 %v359, %v439
          %v456 = vmul.f32 %v360, %v440
          %v457 = vmul.f32 %v361, %v441
          %v458 = vmul.f32 %v362, %v442
          %v459 = vmul.f32 %v363, %v443
          %v460 = vmul.f32 %v364, %v444
          %v461 = vmul.f32 %v365, %v445
          %v462 = vmul.f32 %v366, %v446
          %v463 = vmul.f32 %v367, %v447
          %v464 = vmul.f32 %v368, %v448
          %v465 = vmul.f32 %v369, %v449
          %v466 = vmul.f32 %v370, %v450
          %v467 = vmul.f32 %v371, %v451
          %v468 = vmul.f32 %v372, %v452
          %v469 = vmul.f32 %v373, %v453
          %v470 = vpack.c.bf16 %v455, %v454
          %v471 = vpack.c.bf16 %v457, %v456
          %v472 = vpack.c.bf16 %v459, %v458
          %v473 = vpack.c.bf16 %v461, %v460
          %v474 = vpack.c.bf16 %v463, %v462
          %v475 = vpack.c.bf16 %v465, %v464
          %v476 = vpack.c.bf16 %v467, %v466
          %v477 = vpack.c.bf16 %v469, %v468
          %v486 = vunpack.c.l.b16 %v470
          %v487 = vunpack.c.h.b16 %v470
          %v488 = vunpack.c.l.b16 %v471
          %v489 = vunpack.c.h.b16 %v471
          %v490 = vunpack.c.l.b16 %v472
          %v491 = vunpack.c.h.b16 %v472
          %v492 = vunpack.c.l.b16 %v473
          %v493 = vunpack.c.h.b16 %v473
          %v494 = vunpack.c.l.b16 %v474
          %v495 = vunpack.c.h.b16 %v474
          %v496 = vunpack.c.l.b16 %v475
          %v497 = vunpack.c.h.b16 %v475
          %v498 = vunpack.c.l.b16 %v476
          %v499 = vunpack.c.h.b16 %v476
          %v500 = vunpack.c.l.b16 %v477
          %v501 = vunpack.c.h.b16 %v477
          %v502 = vpack.c.b16 %v486, %v486
          %v503 = vpack.c.b16 %v487, %v487
          %v504 = vpack.c.b16 %v488, %v488
          %v505 = vpack.c.b16 %v489, %v489
          %v506 = vpack.c.b16 %v490, %v490
          %v507 = vpack.c.b16 %v491, %v491
          %v508 = vpack.c.b16 %v492, %v492
          %v509 = vpack.c.b16 %v493, %v493
          %v510 = vpack.c.b16 %v494, %v494
          %v511 = vpack.c.b16 %v495, %v495
          %v512 = vpack.c.b16 %v496, %v496
          %v513 = vpack.c.b16 %v497, %v497
          %v514 = vpack.c.b16 %v498, %v498
          %v515 = vpack.c.b16 %v499, %v499
          %v516 = vpack.c.b16 %v500, %v500
          %v517 = vpack.c.b16 %v501, %v501
          %534 = vst [vmem:[%s290] sm:$0xf] %v502
          %535 = vst [vmem:[%s290 + $0x4] sm:$0xf] %v503
          %536 = vst [vmem:[%s290 + $0x8] sm:$0xf] %v504
          %537 = vst [vmem:[%s290 + $0xc] sm:$0xf] %v505
          %538 = vst [vmem:[%s290 + $0x10] sm:$0xf] %v506
          %539 = vst [vmem:[%s290 + $0x14] sm:$0xf] %v507
          %540 = vst [vmem:[%s290 + $0x18] sm:$0xf] %v508
          %541 = vst [vmem:[%s290 + $0x1c] sm:$0xf] %v509
          %542 = vst [vmem:[%s290 + $0x20] sm:$0xf] %v510
          %543 = vst [vmem:[%s290 + $0x24] sm:$0xf] %v511
          %544 = vst [vmem:[%s290 + $0x28] sm:$0xf] %v512
          %545 = vst [vmem:[%s290 + $0x2c] sm:$0xf] %v513
          %546 = vst [vmem:[%s290 + $0x30] sm:$0xf] %v514
          %547 = vst [vmem:[%s290 + $0x34] sm:$0xf] %v515
          %548 = vst [vmem:[%s290 + $0x38] sm:$0xf] %v516
          %549 = vst [vmem:[%s290 + $0x3c] sm:$0xf] %v517
        $region52: #{tpu_custom_call.1} parent=35 // pred_fallthru
          _
        %p550 = scmp.gt.s32.totalorder %s337, 128
        // Predicated region
        $region53: #{tpu_custom_call.1} parent=35 // pred_check
          %p551 = pneg %p550
        $region54: #{tpu_custom_call.1} parent=35 // pred_check_branch
          %553 = sbr.rel (%p551) target = $region56
        $region55: #{tpu_custom_call.1} parent=35 // pred_region
          %v554 = vld [vmem:[%s248] sm:$0xf]
          %v555 = vld [vmem:[%s248 + $0x4] sm:$0xf]
          %v556 = vld [vmem:[%s248 + $0x8] sm:$0xf]
          %v557 = vld [vmem:[%s248 + $0xc] sm:$0xf]
          %v558 = vld [vmem:[%s248 + $0x10] sm:$0xf]
          %v559 = vld [vmem:[%s248 + $0x14] sm:$0xf]
          %v560 = vld [vmem:[%s248 + $0x18] sm:$0xf]
          %v561 = vld [vmem:[%s248 + $0x1c] sm:$0xf]
          %v562 = vld [vmem:[%s248 + $0x20] sm:$0xf]
          %v563 = vld [vmem:[%s248 + $0x24] sm:$0xf]
          %v564 = vld [vmem:[%s248 + $0x28] sm:$0xf]
          %v565 = vld [vmem:[%s248 + $0x2c] sm:$0xf]
          %v566 = vld [vmem:[%s248 + $0x30] sm:$0xf]
          %v567 = vld [vmem:[%s248 + $0x34] sm:$0xf]
          %v568 = vld [vmem:[%s248 + $0x38] sm:$0xf]
          %v569 = vld [vmem:[%s248 + $0x3c] sm:$0xf]
          %v570 = vld [vmem:[#allocation7] sm:$0xf]
          %v571 = vld [vmem:[#allocation7 + $0x4] sm:$0xf]
          %v572 = vld [vmem:[#allocation7 + $0x8] sm:$0xf]
          %v573 = vld [vmem:[#allocation7 + $0xc] sm:$0xf]
          %v574 = vld [vmem:[#allocation7 + $0x10] sm:$0xf]
          %v575 = vld [vmem:[#allocation7 + $0x14] sm:$0xf]
          %v576 = vld [vmem:[#allocation7 + $0x18] sm:$0xf]
          %v577 = vld [vmem:[#allocation7 + $0x1c] sm:$0xf]
          %v578 = vld [vmem:[#allocation7 + $0x20] sm:$0xf]
          %v579 = vld [vmem:[#allocation7 + $0x24] sm:$0xf]
          %v580 = vld [vmem:[#allocation7 + $0x28] sm:$0xf]
          %v581 = vld [vmem:[#allocation7 + $0x2c] sm:$0xf]
          %v582 = vld [vmem:[#allocation7 + $0x30] sm:$0xf]
          %v583 = vld [vmem:[#allocation7 + $0x34] sm:$0xf]
          %v584 = vld [vmem:[#allocation7 + $0x38] sm:$0xf]
          %v585 = vld [vmem:[#allocation7 + $0x3c] sm:$0xf]
          %v586 = vld [vmem:[%s3] sm:$0x1]
          %v588 = vlaneseq
          %v589 = vshrl.u32 %v588, 7
          %v590 = vsub.s32 0, %v589
          %v591 = vrot.slane %v586, %v590
          %v609 = vunpack.c.l.b16 %v554
          %v610 = vunpack.c.l.b16 %v555
          %v611 = vunpack.c.l.b16 %v556
          %v612 = vunpack.c.l.b16 %v557
          %v613 = vunpack.c.l.b16 %v558
          %v614 = vunpack.c.l.b16 %v559
          %v615 = vunpack.c.l.b16 %v560
          %v616 = vunpack.c.l.b16 %v561
          %v617 = vunpack.c.l.b16 %v562
          %v618 = vunpack.c.l.b16 %v563
          %v619 = vunpack.c.l.b16 %v564
          %v620 = vunpack.c.l.b16 %v565
          %v621 = vunpack.c.l.b16 %v566
          %v622 = vunpack.c.l.b16 %v567
          %v623 = vunpack.c.l.b16 %v568
          %v624 = vunpack.c.l.b16 %v569
          %v625 = vpack.c.b16 %v610, %v609
          %v626 = vpack.c.b16 %v612, %v611
          %v627 = vpack.c.b16 %v614, %v613
          %v628 = vpack.c.b16 %v616, %v615
          %v629 = vpack.c.b16 %v618, %v617
          %v630 = vpack.c.b16 %v620, %v619
          %v631 = vpack.c.b16 %v622, %v621
          %v632 = vpack.c.b16 %v624, %v623
          %v657 = vunpack.c.l.b16 %v570
          %v658 = vunpack.c.l.b16 %v571
          %v659 = vunpack.c.l.b16 %v572
          %v660 = vunpack.c.l.b16 %v573
          %v661 = vunpack.c.l.b16 %v574
          %v662 = vunpack.c.l.b16 %v575
          %v663 = vunpack.c.l.b16 %v576
          %v664 = vunpack.c.l.b16 %v577
          %v665 = vunpack.c.l.b16 %v578
          %v666 = vunpack.c.l.b16 %v579
          %v667 = vunpack.c.l.b16 %v580
          %v668 = vunpack.c.l.b16 %v581
          %v669 = vunpack.c.l.b16 %v582
          %v670 = vunpack.c.l.b16 %v583
          %v671 = vunpack.c.l.b16 %v584
          %v672 = vunpack.c.l.b16 %v585
          %v673 = vpack.c.b16 %v658, %v657
          %v674 = vpack.c.b16 %v660, %v659
          %v675 = vpack.c.b16 %v662, %v661
          %v676 = vpack.c.b16 %v664, %v663
          %v677 = vpack.c.b16 %v666, %v665
          %v678 = vpack.c.b16 %v668, %v667
          %v679 = vpack.c.b16 %v670, %v669
          %v680 = vpack.c.b16 %v672, %v671
          %689 = vmatprep.subr.bf16.mxu0 0
          %690 = vmatpush1.bf16.msra.mxu0 %v680
          %691 = vmatprep.subr.bf16.mxu0 0
          %692 = vmatpush1.bf16.msra.mxu0 %v679
          %693 = vmatprep.subr.bf16.mxu0 0
          %694 = vmatpush1.bf16.msra.mxu0 %v678
          %695 = vmatprep.subr.bf16.mxu0 0
          %696 = vmatpush1.bf16.msra.mxu0 %v677
          %697 = vmatprep.subr.bf16.mxu0 0
          %698 = vmatpush1.bf16.msra.mxu0 %v676
          %699 = vmatprep.subr.bf16.mxu0 0
          %700 = vmatpush1.bf16.msra.mxu0 %v675
          %701 = vmatprep.subr.bf16.mxu0 0
          %702 = vmatpush1.bf16.msra.mxu0 %v674
          %703 = vmatprep.subr.bf16.mxu0 0
          %704 = vmatpush1.bf16.msra.mxu0 %v673
          %705 = vmatprep.subr.bf16.mxu0 0
          %706 = vmatpush2.bf16.msra.mxu0 0
          %707 = vmatprep.subr.bf16.mxu0 0
          %708 = vmatpush2.bf16.msra.mxu0 0
          %709 = vmatprep.subr.bf16.mxu0 0
          %710 = vmatpush2.bf16.msra.mxu0 0
          %711 = vmatprep.subr.bf16.mxu0 0
          %712 = vmatpush2.bf16.msra.mxu0 0
          %713 = vmatprep.subr.bf16.mxu0 0
          %714 = vmatpush2.bf16.msra.mxu0 0
          %715 = vmatprep.subr.bf16.mxu0 0
          %716 = vmatpush2.bf16.msra.mxu0 0
          %717 = vmatprep.subr.bf16.mxu0 0
          %718 = vmatpush2.bf16.msra.mxu0 0
          %719 = vmatprep.subr.bf16.mxu0 0
          %720 = vmatpush2.bf16.msra.mxu0 0
          %721 = vmatprep.mubr.bf16.mxu0 0
          %722 = vmatmul.mubr.bf16.gmra.mxu0 %v625
          %v723 = vpop.f32.mrf.mxu0
          %v724 = vadd.f32 %v591, %v723
          %v725 = vpop.f32.mrf.mxu0
          %v726 = vpop.f32.mrf.mxu0
          %v727 = vadd.f32 %v591, %v726
          %v728 = vpop.f32.mrf.mxu0
          %729 = vmatprep.mubr.bf16.mxu0 0
          %730 = vmatmul.mubr.bf16.gmra.mxu0 %v626
          %v731 = vpop.f32.mrf.mxu0
          %v732 = vadd.f32 %v591, %v731
          %v733 = vpop.f32.mrf.mxu0
          %v734 = vpop.f32.mrf.mxu0
          %v735 = vadd.f32 %v591, %v734
          %v736 = vpop.f32.mrf.mxu0
          %737 = vmatprep.mubr.bf16.mxu0 0
          %738 = vmatmul.mubr.bf16.gmra.mxu0 %v627
          %v739 = vpop.f32.mrf.mxu0
          %v740 = vadd.f32 %v591, %v739
          %v741 = vpop.f32.mrf.mxu0
          %v742 = vpop.f32.mrf.mxu0
          %v743 = vadd.f32 %v591, %v742
          %v744 = vpop.f32.mrf.mxu0
          %745 = vmatprep.mubr.bf16.mxu0 0
          %746 = vmatmul.mubr.bf16.gmra.mxu0 %v628
          %v747 = vpop.f32.mrf.mxu0
          %v748 = vadd.f32 %v591, %v747
          %v749 = vpop.f32.mrf.mxu0
          %v750 = vpop.f32.mrf.mxu0
          %v751 = vadd.f32 %v591, %v750
          %v752 = vpop.f32.mrf.mxu0
          %753 = vmatprep.mubr.bf16.mxu0 0
          %754 = vmatmul.mubr.bf16.gmra.mxu0 %v629
          %v755 = vpop.f32.mrf.mxu0
          %v756 = vadd.f32 %v591, %v755
          %v757 = vpop.f32.mrf.mxu0
          %v758 = vpop.f32.mrf.mxu0
          %v759 = vadd.f32 %v591, %v758
          %v760 = vpop.f32.mrf.mxu0
          %761 = vmatprep.mubr.bf16.mxu0 0
          %762 = vmatmul.mubr.bf16.gmra.mxu0 %v630
          %v763 = vpop.f32.mrf.mxu0
          %v764 = vadd.f32 %v591, %v763
          %v765 = vpop.f32.mrf.mxu0
          %v766 = vpop.f32.mrf.mxu0
          %v767 = vadd.f32 %v591, %v766
          %v768 = vpop.f32.mrf.mxu0
          %769 = vmatprep.mubr.bf16.mxu0 0
          %770 = vmatmul.mubr.bf16.gmra.mxu0 %v631
          %v771 = vpop.f32.mrf.mxu0
          %v772 = vadd.f32 %v591, %v771
          %v773 = vpop.f32.mrf.mxu0
          %v774 = vpop.f32.mrf.mxu0
          %v775 = vadd.f32 %v591, %v774
          %v776 = vpop.f32.mrf.mxu0
          %777 = vmatprep.mubr.bf16.mxu0 0
          %778 = vmatmul.mubr.bf16.gmra.mxu0 %v632
          %v779 = vpop.f32.mrf.mxu0
          %v780 = vadd.f32 %v591, %v779
          %v781 = vpop.f32.mrf.mxu0
          %v782 = vpop.f32.mrf.mxu0
          %v783 = vadd.f32 %v591, %v782
          %v784 = vpop.f32.mrf.mxu0
          %785 = vdwg.mxu0
          %vm786 = vcmp.lt.s32.totalorder %v321, 128
          %vm787 = vcmp.lt.s32.totalorder %v322, 128
          %vm788 = vcmp.lt.s32.totalorder %v323, 128
          %vm789 = vcmp.lt.s32.totalorder %v324, 128
          %vm790 = vcmp.lt.s32.totalorder %v325, 128
          %vm791 = vcmp.lt.s32.totalorder %v326, 128
          %vm792 = vcmp.lt.s32.totalorder %v327, 128
          %vm793 = vcmp.lt.s32.totalorder %v328, 128
          %vm794 = vcmp.lt.s32.totalorder %v329, 128
          %vm795 = vcmp.lt.s32.totalorder %v330, 128
          %vm796 = vcmp.lt.s32.totalorder %v331, 128
          %vm797 = vcmp.lt.s32.totalorder %v332, 128
          %vm798 = vcmp.lt.s32.totalorder %v333, 128
          %vm799 = vcmp.lt.s32.totalorder %v334, 128
          %vm800 = vcmp.lt.s32.totalorder %v335, 128
          %vm801 = vcmp.lt.s32.totalorder %v336, 128
          %v802 = vld [vmem:[%s257] sm:$0xf]
          %v803 = vld [vmem:[%s257 + $0x4] sm:$0xf]
          %v804 = vld [vmem:[%s257 + $0x8] sm:$0xf]
          %v805 = vld [vmem:[%s257 + $0xc] sm:$0xf]
          %v806 = vld [vmem:[%s257 + $0x10] sm:$0xf]
          %v807 = vld [vmem:[%s257 + $0x14] sm:$0xf]
          %v808 = vld [vmem:[%s257 + $0x18] sm:$0xf]
          %v809 = vld [vmem:[%s257 + $0x1c] sm:$0xf]
          %v810 = vld [vmem:[%s257 + $0x20] sm:$0xf]
          %v811 = vld [vmem:[%s257 + $0x24] sm:$0xf]
          %v812 = vld [vmem:[%s257 + $0x28] sm:$0xf]
          %v813 = vld [vmem:[%s257 + $0x2c] sm:$0xf]
          %v814 = vld [vmem:[%s257 + $0x30] sm:$0xf]
          %v815 = vld [vmem:[%s257 + $0x34] sm:$0xf]
          %v816 = vld [vmem:[%s257 + $0x38] sm:$0xf]
          %v817 = vld [vmem:[%s257 + $0x3c] sm:$0xf]
          %v818 = vunpack.c.l.bf16 %v802
          %v819 = vunpack.c.l.bf16 %v803
          %v820 = vunpack.c.l.bf16 %v804
          %v821 = vunpack.c.l.bf16 %v805
          %v822 = vunpack.c.l.bf16 %v806
          %v823 = vunpack.c.l.bf16 %v807
          %v824 = vunpack.c.l.bf16 %v808
          %v825 = vunpack.c.l.bf16 %v809
          %v826 = vunpack.c.l.bf16 %v810
          %v827 = vunpack.c.l.bf16 %v811
          %v828 = vunpack.c.l.bf16 %v812
          %v829 = vunpack.c.l.bf16 %v813
          %v830 = vunpack.c.l.bf16 %v814
          %v831 = vunpack.c.l.bf16 %v815
          %v832 = vunpack.c.l.bf16 %v816
          %v833 = vunpack.c.l.bf16 %v817
          %v834 = vsel %vm786, 1, 0
          %v835 = vsel %vm787, 1, 0
          %v836 = vsel %vm788, 1, 0
          %v837 = vsel %vm789, 1, 0
          %v838 = vsel %vm790, 1, 0
          %v839 = vsel %vm791, 1, 0
          %v840 = vsel %vm792, 1, 0
          %v841 = vsel %vm793, 1, 0
          %v842 = vsel %vm794, 1, 0
          %v843 = vsel %vm795, 1, 0
          %v844 = vsel %vm796, 1, 0
          %v845 = vsel %vm797, 1, 0
          %v846 = vsel %vm798, 1, 0
          %v847 = vsel %vm799, 1, 0
          %v848 = vsel %vm800, 1, 0
          %v849 = vsel %vm801, 1, 0
          %vm850 = vcmp.eq.s32.totalorder %v834, 1
          %vm851 = vcmp.eq.s32.totalorder %v835, 1
          %vm852 = vcmp.eq.s32.totalorder %v836, 1
          %vm853 = vcmp.eq.s32.totalorder %v837, 1
          %vm854 = vcmp.eq.s32.totalorder %v838, 1
          %vm855 = vcmp.eq.s32.totalorder %v839, 1
          %vm856 = vcmp.eq.s32.totalorder %v840, 1
          %vm857 = vcmp.eq.s32.totalorder %v841, 1
          %vm858 = vcmp.eq.s32.totalorder %v842, 1
          %vm859 = vcmp.eq.s32.totalorder %v843, 1
          %vm860 = vcmp.eq.s32.totalorder %v844, 1
          %vm861 = vcmp.eq.s32.totalorder %v845, 1
          %vm862 = vcmp.eq.s32.totalorder %v846, 1
          %vm863 = vcmp.eq.s32.totalorder %v847, 1
          %vm864 = vcmp.eq.s32.totalorder %v848, 1
          %vm865 = vcmp.eq.s32.totalorder %v849, 1
          %v866 = vsel %vm850, %v818, %v724
          %v867 = vsel %vm851, %v819, %v727
          %v868 = vsel %vm852, %v820, %v732
          %v869 = vsel %vm853, %v821, %v735
          %v870 = vsel %vm854, %v822, %v740
          %v871 = vsel %vm855, %v823, %v743
          %v872 = vsel %vm856, %v824, %v748
          %v873 = vsel %vm857, %v825, %v751
          %v874 = vsel %vm858, %v826, %v756
          %v875 = vsel %vm859, %v827, %v759
          %v876 = vsel %vm860, %v828, %v764
          %v877 = vsel %vm861, %v829, %v767
          %v878 = vsel %vm862, %v830, %v772
          %v879 = vsel %vm863, %v831, %v775
          %v880 = vsel %vm864, %v832, %v780
          %v881 = vsel %vm865, %v833, %v783
          %v882 = vmul.f32 %v866, %v866
          %v883 = vmul.f32 %v867, %v867
          %v884 = vmul.f32 %v868, %v868
          %v885 = vmul.f32 %v869, %v869
          %v886 = vmul.f32 %v870, %v870
          %v887 = vmul.f32 %v871, %v871
          %v888 = vmul.f32 %v872, %v872
          %v889 = vmul.f32 %v873, %v873
          %v890 = vmul.f32 %v874, %v874
          %v891 = vmul.f32 %v875, %v875
          %v892 = vmul.f32 %v876, %v876
          %v893 = vmul.f32 %v877, %v877
          %v894 = vmul.f32 %v878, %v878
          %v895 = vmul.f32 %v879, %v879
          %v896 = vmul.f32 %v880, %v880
          %v897 = vmul.f32 %v881, %v881
          %898 = vadd.xlane.f32.xlu0 %v882
          %v899 = vpop.xlane.xlu0 %898
          %900 = vadd.xlane.f32.xlu0 %v883
          %v901 = vpop.xlane.xlu0 %900
          %902 = vadd.xlane.f32.xlu0 %v884
          %v903 = vpop.xlane.xlu0 %902
          %904 = vadd.xlane.f32.xlu0 %v885
          %v905 = vpop.xlane.xlu0 %904
          %906 = vadd.xlane.f32.xlu0 %v886
          %v907 = vpop.xlane.xlu0 %906
          %908 = vadd.xlane.f32.xlu0 %v887
          %v909 = vpop.xlane.xlu0 %908
          %910 = vadd.xlane.f32.xlu0 %v888
          %v911 = vpop.xlane.xlu0 %910
          %912 = vadd.xlane.f32.xlu0 %v889
          %v913 = vpop.xlane.xlu0 %912
          %914 = vadd.xlane.f32.xlu0 %v890
          %v915 = vpop.xlane.xlu0 %914
          %916 = vadd.xlane.f32.xlu0 %v891
          %v917 = vpop.xlane.xlu0 %916
          %918 = vadd.xlane.f32.xlu0 %v892
          %v919 = vpop.xlane.xlu0 %918
          %920 = vadd.xlane.f32.xlu0 %v893
          %v921 = vpop.xlane.xlu0 %920
          %922 = vadd.xlane.f32.xlu0 %v894
          %v923 = vpop.xlane.xlu0 %922
          %924 = vadd.xlane.f32.xlu0 %v895
          %v925 = vpop.xlane.xlu0 %924
          %926 = vadd.xlane.f32.xlu0 %v896
          %v927 = vpop.xlane.xlu0 %926
          %928 = vadd.xlane.f32.xlu0 %v897
          %v929 = vpop.xlane.xlu0 %928
          %v930 = vmax.f32 %v899, 1e-24
          %v931 = vmax.f32 %v901, 1e-24
          %v932 = vmax.f32 %v903, 1e-24
          %v933 = vmax.f32 %v905, 1e-24
          %v934 = vmax.f32 %v907, 1e-24
          %v935 = vmax.f32 %v909, 1e-24
          %v936 = vmax.f32 %v911, 1e-24
          %v937 = vmax.f32 %v913, 1e-24
          %v938 = vmax.f32 %v915, 1e-24
          %v939 = vmax.f32 %v917, 1e-24
          %v940 = vmax.f32 %v919, 1e-24
          %v941 = vmax.f32 %v921, 1e-24
          %v942 = vmax.f32 %v923, 1e-24
          %v943 = vmax.f32 %v925, 1e-24
          %v944 = vmax.f32 %v927, 1e-24
          %v945 = vmax.f32 %v929, 1e-24
          %v946 = vrsqrt.pop %v930
          %v947 = vrsqrt.pop %v931
          %v948 = vrsqrt.pop %v932
          %v949 = vrsqrt.pop %v933
          %v950 = vrsqrt.pop %v934
          %v951 = vrsqrt.pop %v935
          %v952 = vrsqrt.pop %v936
          %v953 = vrsqrt.pop %v937
          %v954 = vrsqrt.pop %v938
          %v955 = vrsqrt.pop %v939
          %v956 = vrsqrt.pop %v940
          %v957 = vrsqrt.pop %v941
          %v958 = vrsqrt.pop %v942
          %v959 = vrsqrt.pop %v943
          %v960 = vrsqrt.pop %v944
          %v961 = vrsqrt.pop %v945
          %v962 = vmul.f32 %v866, %v946
          %v963 = vmul.f32 %v867, %v947
          %v964 = vmul.f32 %v868, %v948
          %v965 = vmul.f32 %v869, %v949
          %v966 = vmul.f32 %v870, %v950
          %v967 = vmul.f32 %v871, %v951
          %v968 = vmul.f32 %v872, %v952
          %v969 = vmul.f32 %v873, %v953
          %v970 = vmul.f32 %v874, %v954
          %v971 = vmul.f32 %v875, %v955
          %v972 = vmul.f32 %v876, %v956
          %v973 = vmul.f32 %v877, %v957
          %v974 = vmul.f32 %v878, %v958
          %v975 = vmul.f32 %v879, %v959
          %v976 = vmul.f32 %v880, %v960
          %v977 = vmul.f32 %v881, %v961
          %v978 = vpack.c.bf16 %v963, %v962
          %v979 = vpack.c.bf16 %v965, %v964
          %v980 = vpack.c.bf16 %v967, %v966
          %v981 = vpack.c.bf16 %v969, %v968
          %v982 = vpack.c.bf16 %v971, %v970
          %v983 = vpack.c.bf16 %v973, %v972
          %v984 = vpack.c.bf16 %v975, %v974
          %v985 = vpack.c.bf16 %v977, %v976
          %v994 = vunpack.c.l.b16 %v978
          %v995 = vunpack.c.h.b16 %v978
          %v996 = vunpack.c.l.b16 %v979
          %v997 = vunpack.c.h.b16 %v979
          %v998 = vunpack.c.l.b16 %v980
          %v999 = vunpack.c.h.b16 %v980
          %v1000 = vunpack.c.l.b16 %v981
          %v1001 = vunpack.c.h.b16 %v981
          %v1002 = vunpack.c.l.b16 %v982
          %v1003 = vunpack.c.h.b16 %v982
          %v1004 = vunpack.c.l.b16 %v983
          %v1005 = vunpack.c.h.b16 %v983
          %v1006 = vunpack.c.l.b16 %v984
          %v1007 = vunpack.c.h.b16 %v984
          %v1008 = vunpack.c.l.b16 %v985
          %v1009 = vunpack.c.h.b16 %v985
          %v1010 = vpack.c.b16 %v994, %v994
          %v1011 = vpack.c.b16 %v995, %v995
          %v1012 = vpack.c.b16 %v996, %v996
          %v1013 = vpack.c.b16 %v997, %v997
          %v1014 = vpack.c.b16 %v998, %v998
          %v1015 = vpack.c.b16 %v999, %v999
          %v1016 = vpack.c.b16 %v1000, %v1000
          %v1017 = vpack.c.b16 %v1001, %v1001
          %v1018 = vpack.c.b16 %v1002, %v1002
          %v1019 = vpack.c.b16 %v1003, %v1003
          %v1020 = vpack.c.b16 %v1004, %v1004
          %v1021 = vpack.c.b16 %v1005, %v1005
          %v1022 = vpack.c.b16 %v1006, %v1006
          %v1023 = vpack.c.b16 %v1007, %v1007
          %v1024 = vpack.c.b16 %v1008, %v1008
          %v1025 = vpack.c.b16 %v1009, %v1009
          %1042 = vst [vmem:[%s290] sm:$0xf] %v1010
          %1043 = vst [vmem:[%s290 + $0x4] sm:$0xf] %v1011
          %1044 = vst [vmem:[%s290 + $0x8] sm:$0xf] %v1012
          %1045 = vst [vmem:[%s290 + $0xc] sm:$0xf] %v1013
          %1046 = vst [vmem:[%s290 + $0x10] sm:$0xf] %v1014
          %1047 = vst [vmem:[%s290 + $0x14] sm:$0xf] %v1015
          %1048 = vst [vmem:[%s290 + $0x18] sm:$0xf] %v1016
          %1049 = vst [vmem:[%s290 + $0x1c] sm:$0xf] %v1017
          %1050 = vst [vmem:[%s290 + $0x20] sm:$0xf] %v1018
          %1051 = vst [vmem:[%s290 + $0x24] sm:$0xf] %v1019
          %1052 = vst [vmem:[%s290 + $0x28] sm:$0xf] %v1020
          %1053 = vst [vmem:[%s290 + $0x2c] sm:$0xf] %v1021
          %1054 = vst [vmem:[%s290 + $0x30] sm:$0xf] %v1022
          %1055 = vst [vmem:[%s290 + $0x34] sm:$0xf] %v1023
          %1056 = vst [vmem:[%s290 + $0x38] sm:$0xf] %v1024
          %1057 = vst [vmem:[%s290 + $0x3c] sm:$0xf] %v1025
        $region56: #{tpu_custom_call.1} parent=35 // pred_fallthru
          _
        %s1058 = sand.u32 %s140, 1
        %s1059 = scalar_lea.sflag [#allocation4], %s1058
        %s1060 = sand.u32 %s140, 1
        %s1061 = smul.addr %s1060, 64
        %s1062 = scalar_lea.vmem [#allocation8], %s1061
        // Predicated region
        $region57: #{tpu_custom_call.1} parent=35 // pred_check
          %p1063 = pneg %p150
        $region58: #{tpu_custom_call.1} parent=35 // pred_check_branch
          %1065 = sbr.rel (%p1063) target = $region60
        $region59: #{tpu_custom_call.1} parent=35 // pred_region
          %s1066 = smul.u32 16, %s24
          %s1068 = ssub.s32 1024, 1024
          %1069 = vsyncadd %s1059, %s1068
          %s1070 = smul.addr %s1066, 64
          %s1071 = scalar_lea.hbm %s4, %s1070
          %s1072 = sshll.u32 %s1062, 4
          %s1073 = int_to_ptr.vmem [resolvable:$true] %s1072
          %1078 = dma.vmem_to_hbm [thread:$0]  %s1073, 1024, %s1071, %s1059, 64, 64, 4
        $region60: #{tpu_custom_call.1} parent=35 // pred_fallthru
          _
      $region36: #{tpu_custom_call.1} parent=5 // pred_fallthru
        _
      %p1079 = scmp.le.s32.totalorder 2, %s19
      // Predicated region
      $region61: #{tpu_custom_call.1} parent=5 // pred_check
        %p1080 = pneg %p1079
      $region62: #{tpu_custom_call.1} parent=5 // pred_check_branch
        %1082 = sbr.rel (%p1080) target = $region64
      $region63: #{tpu_custom_call.1} parent=5 // pred_region
        %s1083 = ssub.s32 %s19, 2
        // Predicated region
        $region65: #{tpu_custom_call.1} parent=63 // pred_check
          %p1084 = pneg %p156
        $region66: #{tpu_custom_call.1} parent=63 // pred_check_branch
          %1086 = sbr.rel (%p1084) target = $region68
        $region67: #{tpu_custom_call.1} parent=63 // pred_region
          %s1087 = sand.u32 %s141, 1
          %s1088 = scalar_lea.sflag [#allocation4], %s1087
          %s1089 = sand.u32 %s141, 1
          %s1090 = smul.addr %s1089, 64
          %s1091 = scalar_lea.vmem [#allocation8], %s1090
          %1092 = dma.done %s1088, 1024
        $region68: #{tpu_custom_call.1} parent=63 // pred_fallthru
          _
      $region64: #{tpu_custom_call.1} parent=5 // pred_fallthru
        _
    $region6: #{tpu_custom_call.1} parent=1 // loop_footer
      %s23 = sadd.s32 1, %s19
    $region7: #{tpu_custom_call.1} parent=1 // loop_footer_branch
      %18 = sbr.rel target = $region3
    $region8: #{tpu_custom_call.1} parent=1 // loop_exit
      _
    %1093 = vsyncpa [#allocation3], 1
    %s1094 = scalar_lea.sflag [#allocation3], 1
    %1095 = vsyncpa %s1094, 1
    %1096 = vsyncpa [#allocation6], 1
    %s1097 = scalar_lea.sflag [#allocation6], 1
    %1098 = vsyncpa %s1097, 1
    %1099 = vsyncpa [#allocation4], 1
    %s1100 = scalar_lea.sflag [#allocation4], 1
    %1101 = vsyncpa %s1100, 1

</llo_original>
